<compile_context>
chip_gen: v7x
topology: tpu7x:2x2x1
jax: 0.10.0
libtpu: 0.0.40
codegen_flags: <defaults>
</compile_context>

<pallas_src>
import jax
import jax.numpy as jnp
from jax.experimental import pallas as pl
from jax.experimental.pallas import tpu as pltpu


def _round_up(n, m):
    return ((n + m - 1) // m) * m


def _vae_kernel(x_ref, eps_ref,
                w1_ref, b1_ref,
                w2m_ref, b2m_ref, w2v_ref, b2v_ref,
                w3_ref, b3_ref, w4_ref, b4_ref,
                recon_ref, mu_ref, logvar_ref):
    x = x_ref[...]

    # ---- encoder: Linear(input_dim, 32) -> ReLU ----
    h = jnp.dot(x, w1_ref[...], preferred_element_type=jnp.float32) + b1_ref[...]
    h = jnp.maximum(h, 0.0)

    # ---- Linear(32, 2*latent_dim), pre-split into mu / logvar halves (no lane chunk) ----
    mu = jnp.dot(h, w2m_ref[...], preferred_element_type=jnp.float32) + b2m_ref[...]
    logvar = jnp.dot(h, w2v_ref[...], preferred_element_type=jnp.float32) + b2v_ref[...]

    # ---- reparameterize: z = mu + eps * exp(0.5 * logvar) ----
    z = mu + eps_ref[...] * jnp.exp(0.5 * logvar)

    # ---- decoder: Linear(latent_dim, 32) -> ReLU -> Linear(32, input_dim) -> Sigmoid ----
    d = jnp.dot(z, w3_ref[...], preferred_element_type=jnp.float32) + b3_ref[...]
    d = jnp.maximum(d, 0.0)
    logits = jnp.dot(d, w4_ref[...], preferred_element_type=jnp.float32) + b4_ref[...]

    recon_ref[...] = jax.nn.sigmoid(logits).astype(recon_ref.dtype)
    mu_ref[...] = mu.astype(mu_ref.dtype)
    logvar_ref[...] = logvar.astype(logvar_ref.dtype)


def vae_forward(x, eps, params, latent_dim, block_rows=1024):
    """VAE forward pass as a batch-tiled Pallas call.

    Returns (recon, mu, logvar), matching the PyTorch module's forward().
    """
    batch, input_dim = x.shape
    w1, b1, w2, b2, w3, b3, w4, b4 = params

    # Split encoder[2] into mu / logvar halves once in plain XLA so the kernel
    # never performs an intra-vreg lane slice.
    w2m, w2v = w2[:, :latent_dim], w2[:, latent_dim:]
    b2m, b2v = b2[:, :latent_dim], b2[:, latent_dim:]

    # Batch tile: a multiple of 8 (sublane), capped at block_rows.  Per-tile
    # footprint is ~hundreds of KB at block_rows=1024 -> fits comfortably in
    # v7x's 64 MiB VMEM as well as v5e/v6e.
    tb = min(_round_up(block_rows, 8), _round_up(batch, 8))
    padded = _round_up(batch, tb)
    if padded != batch:
        pad = padded - batch
        x = jnp.pad(x, ((0, pad), (0, 0)))
        eps = jnp.pad(eps, ((0, pad), (0, 0)))

    grid = (pl.cdiv(padded, tb),)

    def rows(feat):
        # Batch-tiled block: streams through the pipeline (double-buffered).
        return pl.BlockSpec((tb, feat), lambda i: (i, 0))

    def resident(arr):
        # Constant block index -> weight stays in VMEM, no per-step re-DMA.
        return pl.BlockSpec(arr.shape, lambda i: (0, 0))

    out_shapes = (
        jax.ShapeDtypeStruct((padded, input_dim), jnp.float32),   # recon
        jax.ShapeDtypeStruct((padded, latent_dim), jnp.float32),  # mu
        jax.ShapeDtypeStruct((padded, latent_dim), jnp.float32),  # logvar
    )

    recon, mu, logvar = pl.pallas_call(
        _vae_kernel,
        grid=grid,
        out_shape=out_shapes,
        in_specs=[
            rows(input_dim),                  # x
            rows(latent_dim),                 # eps
            resident(w1), resident(b1),
            resident(w2m), resident(b2m),
            resident(w2v), resident(b2v),
            resident(w3), resident(b3),
            resident(w4), resident(b4),
        ],
        out_specs=(rows(input_dim), rows(latent_dim), rows(latent_dim)),
        compiler_params=pltpu.CompilerParams(
            dimension_semantics=("parallel",),     # batch tiles are independent (megacore-friendly)
            vmem_limit_bytes=32 * 1024 * 1024,
        ),
    )(x, eps, w1, b1, w2m, b2m, w2v, b2v, w3, b3, w4, b4)

    if padded != batch:
        recon, mu, logvar = recon[:batch], mu[:batch], logvar[:batch]
    return recon, mu, logvar


def init_params(key, input_dim, latent_dim, hidden=32):
    """Deterministic parameter init (shapes match the PyTorch module's layers)."""
    ks = jax.random.split(key, 8)

    def linear(kw, kb, fan_in, fan_out):
        bound = 1.0 / jnp.sqrt(fan_in)
        w = jax.random.uniform(kw, (fan_in, fan_out), jnp.float32, -bound, bound)
        b = jax.random.uniform(kb, (1, fan_out), jnp.float32, -bound, bound)
        return w, b

    w1, b1 = linear(ks[0], ks[1], input_dim, hidden)            # encoder[0]
    w2, b2 = linear(ks[2], ks[3], hidden, latent_dim * 2)       # encoder[2]
    w3, b3 = linear(ks[4], ks[5], latent_dim, hidden)           # decoder[0]
    w4, b4 = linear(ks[6], ks[7], hidden, input_dim)            # decoder[2]
    return (w1, b1, w2, b2, w3, b3, w4, b4)


def vae_reference(x, eps, params, latent_dim):
    """Pure-JAX reference for correctness checking."""
    w1, b1, w2, b2, w3, b3, w4, b4 = params
    h = jnp.maximum(x @ w1 + b1, 0.0)
    enc = h @ w2 + b2
    mu, logvar = enc[:, :latent_dim], enc[:, latent_dim:]
    z = mu + eps * jnp.exp(0.5 * logvar)
    d = jnp.maximum(z @ w3 + b3, 0.0)
    recon = jax.nn.sigmoid(d @ w4 + b4)
    return recon, mu, logvar


if __name__ == "__main__":
    input_dim, latent_dim = 16, 8

    key = jax.random.PRNGKey(0)
    k_params, k_x1, k_e1, k_x2, k_e2 = jax.random.split(key, 5)
    params = init_params(k_params, input_dim, latent_dim)

    # --- small single-tile case (batch=8) ---
    # eps is drawn in the wrapper (deterministic) and passed into the kernel,
    # mirroring torch.randn_like(std) in reparameterize().
    x1 = jax.random.uniform(k_x1, (8, input_dim), jnp.float32)
    eps1 = jax.random.normal(k_e1, (8, latent_dim), jnp.float32)
    out1 = vae_forward(x1, eps1, params, latent_dim)
    jax.block_until_ready(out1)
    ref1 = vae_reference(x1, eps1, params, latent_dim)
    for got, want in zip(out1, ref1):
        assert jnp.allclose(got, want, atol=1e-5, rtol=1e-5)

    # --- multi-step grid + batch-padding case (batch not a multiple of the tile) ---
    x2 = jax.random.uniform(k_x2, (300, input_dim), jnp.float32)
    eps2 = jax.random.normal(k_e2, (300, latent_dim), jnp.float32)
    out2 = vae_forward(x2, eps2, params, latent_dim, block_rows=128)
    jax.block_until_ready(out2)
    ref2 = vae_reference(x2, eps2, params, latent_dim)
    for got, want in zip(out2, ref2):
        assert jnp.allclose(got, want, atol=1e-5, rtol=1e-5)

    print("KERNEL_OK")
</pallas_src>

<mosaic_0001>
module attributes {stable_mosaic.version = 11 : i64} {
  func.func @_vae_kernel(%arg0: i32, %arg1: memref<8x16xf32, #tpu.memory_space<vmem>>, %arg2: memref<8x8xf32, #tpu.memory_space<vmem>>, %arg3: memref<16x32xf32, #tpu.memory_space<vmem>>, %arg4: memref<1x32xf32, #tpu.memory_space<vmem>>, %arg5: memref<32x8xf32, #tpu.memory_space<vmem>>, %arg6: memref<1x8xf32, #tpu.memory_space<vmem>>, %arg7: memref<32x8xf32, #tpu.memory_space<vmem>>, %arg8: memref<1x8xf32, #tpu.memory_space<vmem>>, %arg9: memref<8x32xf32, #tpu.memory_space<vmem>>, %arg10: memref<1x32xf32, #tpu.memory_space<vmem>>, %arg11: memref<32x16xf32, #tpu.memory_space<vmem>>, %arg12: memref<1x16xf32, #tpu.memory_space<vmem>>, %arg13: memref<8x16xf32, #tpu.memory_space<vmem>>, %arg14: memref<8x8xf32, #tpu.memory_space<vmem>>, %arg15: memref<8x8xf32, #tpu.memory_space<vmem>>) attributes {dimension_semantics = [#tpu.dimension_semantics<parallel>], iteration_bounds = array<i64: 1>, scalar_prefetch = 0 : i64, scratch_operands = 0 : i64, tpu.core_type = #tpu.core_type<tc>, window_params = [{transform_indices = @transform_0, window_bounds = array<i64: 8, 16>}, {transform_indices = @transform_1, window_bounds = array<i64: 8, 8>}, {pipeline_mode = #tpu.pipeline_mode<synchronous>, transform_indices = @transform_2, window_bounds = array<i64: 16, 32>}, {pipeline_mode = #tpu.pipeline_mode<synchronous>, transform_indices = @transform_3, window_bounds = array<i64: 1, 32>}, {pipeline_mode = #tpu.pipeline_mode<synchronous>, transform_indices = @transform_4, window_bounds = array<i64: 32, 8>}, {pipeline_mode = #tpu.pipeline_mode<synchronous>, transform_indices = @transform_5, window_bounds = array<i64: 1, 8>}, {pipeline_mode = #tpu.pipeline_mode<synchronous>, transform_indices = @transform_6, window_bounds = array<i64: 32, 8>}, {pipeline_mode = #tpu.pipeline_mode<synchronous>, transform_indices = @transform_7, window_bounds = array<i64: 1, 8>}, {pipeline_mode = #tpu.pipeline_mode<synchronous>, transform_indices = @transform_8, window_bounds = array<i64: 8, 32>}, {pipeline_mode = #tpu.pipeline_mode<synchronous>, transform_indices = @transform_9, window_bounds = array<i64: 1, 32>}, {pipeline_mode = #tpu.pipeline_mode<synchronous>, transform_indices = @transform_10, window_bounds = array<i64: 32, 16>}, {pipeline_mode = #tpu.pipeline_mode<synchronous>, transform_indices = @transform_11, window_bounds = array<i64: 1, 16>}, {transform_indices = @transform_12, window_bounds = array<i64: 8, 16>}, {transform_indices = @transform_13, window_bounds = array<i64: 8, 8>}, {transform_indices = @transform_14, window_bounds = array<i64: 8, 8>}]} {
    %c0 = arith.constant 0 : index
    %c0_0 = arith.constant 0 : index
    %0 = vector.load %arg1[%c0, %c0_0] : memref<8x16xf32, #tpu.memory_space<vmem>>, vector<8x16xf32>
    %c0_1 = arith.constant 0 : index
    %c0_2 = arith.constant 0 : index
    %1 = vector.load %arg3[%c0_1, %c0_2] : memref<16x32xf32, #tpu.memory_space<vmem>>, vector<16x32xf32>
    %cst = arith.constant dense<0.000000e+00> : vector<8x32xf32>
    %2 = tpu.matmul %0, %1, %cst {dimension_numbers = #tpu.dot_dimension_numbers<[1], [0], [0], [1], [0, 0, 1, 1], [], []>} : vector<8x16xf32>, vector<16x32xf32>, vector<8x32xf32> -> vector<8x32xf32>
    %c0_3 = arith.constant 0 : index
    %c0_4 = arith.constant 0 : index
    %3 = vector.load %arg4[%c0_3, %c0_4] : memref<1x32xf32, #tpu.memory_space<vmem>>, vector<1x32xf32>
    %4 = vector.broadcast %3 : vector<1x32xf32> to vector<8x32xf32>
    %5 = arith.addf %2, %4 : vector<8x32xf32>
    %cst_5 = arith.constant 0.000000e+00 : f32
    %6 = vector.broadcast %cst_5 : f32 to vector<8x32xf32>
    %7 = arith.maximumf %5, %6 : vector<8x32xf32>
    %c0_6 = arith.constant 0 : index
    %c0_7 = arith.constant 0 : index
    %8 = vector.load %arg5[%c0_6, %c0_7] : memref<32x8xf32, #tpu.memory_space<vmem>>, vector<32x8xf32>
    %cst_8 = arith.constant dense<0.000000e+00> : vector<8x8xf32>
    %9 = tpu.matmul %7, %8, %cst_8 {dimension_numbers = #tpu.dot_dimension_numbers<[1], [0], [0], [1], [0, 0, 1, 1], [], []>} : vector<8x32xf32>, vector<32x8xf32>, vector<8x8xf32> -> vector<8x8xf32>
    %c0_9 = arith.constant 0 : index
    %c0_10 = arith.constant 0 : index
    %10 = vector.load %arg6[%c0_9, %c0_10] : memref<1x8xf32, #tpu.memory_space<vmem>>, vector<1x8xf32>
    %11 = vector.broadcast %10 : vector<1x8xf32> to vector<8x8xf32>
    %12 = arith.addf %9, %11 : vector<8x8xf32>
    %c0_11 = arith.constant 0 : index
    %c0_12 = arith.constant 0 : index
    %13 = vector.load %arg7[%c0_11, %c0_12] : memref<32x8xf32, #tpu.memory_space<vmem>>, vector<32x8xf32>
    %cst_13 = arith.constant dense<0.000000e+00> : vector<8x8xf32>
    %14 = tpu.matmul %7, %13, %cst_13 {dimension_numbers = #tpu.dot_dimension_numbers<[1], [0], [0], [1], [0, 0, 1, 1], [], []>} : vector<8x32xf32>, vector<32x8xf32>, vector<8x8xf32> -> vector<8x8xf32>
    %c0_14 = arith.constant 0 : index
    %c0_15 = arith.constant 0 : index
    %15 = vector.load %arg8[%c0_14, %c0_15] : memref<1x8xf32, #tpu.memory_space<vmem>>, vector<1x8xf32>
    %16 = vector.broadcast %15 : vector<1x8xf32> to vector<8x8xf32>
    %17 = arith.addf %14, %16 : vector<8x8xf32>
    %c0_16 = arith.constant 0 : index
    %c0_17 = arith.constant 0 : index
    %18 = vector.load %arg2[%c0_16, %c0_17] : memref<8x8xf32, #tpu.memory_space<vmem>>, vector<8x8xf32>
    %cst_18 = arith.constant 5.000000e-01 : f32
    %19 = vector.broadcast %cst_18 : f32 to vector<8x8xf32>
    %20 = arith.mulf %19, %17 : vector<8x8xf32>
    %21 = math.exp %20 : vector<8x8xf32>
    %22 = arith.mulf %18, %21 : vector<8x8xf32>
    %23 = arith.addf %12, %22 : vector<8x8xf32>
    %c0_19 = arith.constant 0 : index
    %c0_20 = arith.constant 0 : index
    %24 = vector.load %arg9[%c0_19, %c0_20] : memref<8x32xf32, #tpu.memory_space<vmem>>, vector<8x32xf32>
    %cst_21 = arith.constant dense<0.000000e+00> : vector<8x32xf32>
    %25 = tpu.matmul %23, %24, %cst_21 {dimension_numbers = #tpu.dot_dimension_numbers<[1], [0], [0], [1], [0, 0, 1, 1], [], []>} : vector<8x8xf32>, vector<8x32xf32>, vector<8x32xf32> -> vector<8x32xf32>
    %c0_22 = arith.constant 0 : index
    %c0_23 = arith.constant 0 : index
    %26 = vector.load %arg10[%c0_22, %c0_23] : memref<1x32xf32, #tpu.memory_space<vmem>>, vector<1x32xf32>
    %27 = vector.broadcast %26 : vector<1x32xf32> to vector<8x32xf32>
    %28 = arith.addf %25, %27 : vector<8x32xf32>
    %cst_24 = arith.constant 0.000000e+00 : f32
    %29 = vector.broadcast %cst_24 : f32 to vector<8x32xf32>
    %30 = arith.maximumf %28, %29 : vector<8x32xf32>
    %c0_25 = arith.constant 0 : index
    %c0_26 = arith.constant 0 : index
    %31 = vector.load %arg11[%c0_25, %c0_26] : memref<32x16xf32, #tpu.memory_space<vmem>>, vector<32x16xf32>
    %cst_27 = arith.constant dense<0.000000e+00> : vector<8x16xf32>
    %32 = tpu.matmul %30, %31, %cst_27 {dimension_numbers = #tpu.dot_dimension_numbers<[1], [0], [0], [1], [0, 0, 1, 1], [], []>} : vector<8x32xf32>, vector<32x16xf32>, vector<8x16xf32> -> vector<8x16xf32>
    %c0_28 = arith.constant 0 : index
    %c0_29 = arith.constant 0 : index
    %33 = vector.load %arg12[%c0_28, %c0_29] : memref<1x16xf32, #tpu.memory_space<vmem>>, vector<1x16xf32>
    %34 = vector.broadcast %33 : vector<1x16xf32> to vector<8x16xf32>
    %35 = arith.addf %32, %34 : vector<8x16xf32>
    %36 = arith.negf %35 : vector<8x16xf32>
    %37 = math.exp %36 : vector<8x16xf32>
    %cst_30 = arith.constant 1.000000e+00 : f32
    %38 = vector.broadcast %cst_30 : f32 to vector<8x16xf32>
    %39 = arith.addf %38, %37 : vector<8x16xf32>
    %40 = arith.divf %38, %39 : vector<8x16xf32>
    %c0_31 = arith.constant 0 : index
    %c0_32 = arith.constant 0 : index
    %41 = vector.load %arg13[%c0_31, %c0_32] : memref<8x16xf32, #tpu.memory_space<vmem>>, vector<8x16xf32>
    tpu.vector_store %arg13[%c0_31, %c0_32], %40 {strides = array<i32>} : memref<8x16xf32, #tpu.memory_space<vmem>>, vector<8x16xf32>,
    %c0_33 = arith.constant 0 : index
    %c0_34 = arith.constant 0 : index
    %42 = vector.load %arg14[%c0_33, %c0_34] : memref<8x8xf32, #tpu.memory_space<vmem>>, vector<8x8xf32>
    tpu.vector_store %arg14[%c0_33, %c0_34], %12 {strides = array<i32>} : memref<8x8xf32, #tpu.memory_space<vmem>>, vector<8x8xf32>,
    %c0_35 = arith.constant 0 : index
    %c0_36 = arith.constant 0 : index
    %43 = vector.load %arg15[%c0_35, %c0_36] : memref<8x8xf32, #tpu.memory_space<vmem>>, vector<8x8xf32>
    tpu.vector_store %arg15[%c0_35, %c0_36], %17 {strides = array<i32>} : memref<8x8xf32, #tpu.memory_space<vmem>>, vector<8x8xf32>,
    return
  }
  func.func @transform_0(%arg0: i32) -> (i32, i32) {
    %c0_i32 = arith.constant 0 : i32
    %c0_i32_0 = arith.constant 0 : i32
    return %arg0, %c0_i32 : i32, i32
  }
  func.func @transform_1(%arg0: i32) -> (i32, i32) {
    %c0_i32 = arith.constant 0 : i32
    %c0_i32_0 = arith.constant 0 : i32
    return %arg0, %c0_i32 : i32, i32
  }
  func.func @transform_2(%arg0: i32) -> (i32, i32) {
    %c0_i32 = arith.constant 0 : i32
    %c0_i32_0 = arith.constant 0 : i32
    %c0_i32_1 = arith.constant 0 : i32
    return %c0_i32, %c0_i32_0 : i32, i32
  }
  func.func @transform_3(%arg0: i32) -> (i32, i32) {
    %c0_i32 = arith.constant 0 : i32
    %c0_i32_0 = arith.constant 0 : i32
    %c0_i32_1 = arith.constant 0 : i32
    return %c0_i32, %c0_i32_0 : i32, i32
  }
  func.func @transform_4(%arg0: i32) -> (i32, i32) {
    %c0_i32 = arith.constant 0 : i32
    %c0_i32_0 = arith.constant 0 : i32
    %c0_i32_1 = arith.constant 0 : i32
    return %c0_i32, %c0_i32_0 : i32, i32
  }
  func.func @transform_5(%arg0: i32) -> (i32, i32) {
    %c0_i32 = arith.constant 0 : i32
    %c0_i32_0 = arith.constant 0 : i32
    %c0_i32_1 = arith.constant 0 : i32
    return %c0_i32, %c0_i32_0 : i32, i32
  }
  func.func @transform_6(%arg0: i32) -> (i32, i32) {
    %c0_i32 = arith.constant 0 : i32
    %c0_i32_0 = arith.constant 0 : i32
    %c0_i32_1 = arith.constant 0 : i32
    return %c0_i32, %c0_i32_0 : i32, i32
  }
  func.func @transform_7(%arg0: i32) -> (i32, i32) {
    %c0_i32 = arith.constant 0 : i32
    %c0_i32_0 = arith.constant 0 : i32
    %c0_i32_1 = arith.constant 0 : i32
    return %c0_i32, %c0_i32_0 : i32, i32
  }
  func.func @transform_8(%arg0: i32) -> (i32, i32) {
    %c0_i32 = arith.constant 0 : i32
    %c0_i32_0 = arith.constant 0 : i32
    %c0_i32_1 = arith.constant 0 : i32
    return %c0_i32, %c0_i32_0 : i32, i32
  }
  func.func @transform_9(%arg0: i32) -> (i32, i32) {
    %c0_i32 = arith.constant 0 : i32
    %c0_i32_0 = arith.constant 0 : i32
    %c0_i32_1 = arith.constant 0 : i32
    return %c0_i32, %c0_i32_0 : i32, i32
  }
  func.func @transform_10(%arg0: i32) -> (i32, i32) {
    %c0_i32 = arith.constant 0 : i32
    %c0_i32_0 = arith.constant 0 : i32
    %c0_i32_1 = arith.constant 0 : i32
    return %c0_i32, %c0_i32_0 : i32, i32
  }
  func.func @transform_11(%arg0: i32) -> (i32, i32) {
    %c0_i32 = arith.constant 0 : i32
    %c0_i32_0 = arith.constant 0 : i32
    %c0_i32_1 = arith.constant 0 : i32
    return %c0_i32, %c0_i32_0 : i32, i32
  }
  func.func @transform_12(%arg0: i32) -> (i32, i32) {
    %c0_i32 = arith.constant 0 : i32
    %c0_i32_0 = arith.constant 0 : i32
    return %arg0, %c0_i32 : i32, i32
  }
  func.func @transform_13(%arg0: i32) -> (i32, i32) {
    %c0_i32 = arith.constant 0 : i32
    %c0_i32_0 = arith.constant 0 : i32
    return %arg0, %c0_i32 : i32, i32
  }
  func.func @transform_14(%arg0: i32) -> (i32, i32) {
    %c0_i32 = arith.constant 0 : i32
    %c0_i32_0 = arith.constant 0 : i32
    return %arg0, %c0_i32 : i32, i32
  }
}

</mosaic_0001>

<llo_original>
// kernel: tpu_custom_call.1
$region0: #{tpu_custom_call.1}
  #allocation0 [shape = 'u32[]', space=smem, size = 0x4, offset = 0x4, fixed_abs, tag = 'smem constant byte address 0x4 - core index']
  #allocation1 [shape = 'u32[144,128]{1,0:T(1,128)}', space=vmem, size = 0x12000, scoped, tag = 'internal scratch']
  %s0 = inlined_call_operand.vmem [shape: f32[8,16], index: 0, kind: input, shape index: {}]
  %s1 = inlined_call_operand.vmem [shape: f32[8,8], index: 1, kind: input, shape index: {}]
  %s2 = inlined_call_operand.vmem [shape: f32[16,32], index: 2, kind: input, shape index: {}]
  %s3 = inlined_call_operand.vmem [shape: f32[1,32], index: 3, kind: input, shape index: {}]
  %s4 = inlined_call_operand.vmem [shape: f32[32,8], index: 4, kind: input, shape index: {}]
  %s5 = inlined_call_operand.vmem [shape: f32[1,8], index: 5, kind: input, shape index: {}]
  %s6 = inlined_call_operand.vmem [shape: f32[32,8], index: 6, kind: input, shape index: {}]
  %s7 = inlined_call_operand.vmem [shape: f32[1,8], index: 7, kind: input, shape index: {}]
  %s8 = inlined_call_operand.vmem [shape: f32[8,32], index: 8, kind: input, shape index: {}]
  %s9 = inlined_call_operand.vmem [shape: f32[1,32], index: 9, kind: input, shape index: {}]
  %s10 = inlined_call_operand.vmem [shape: f32[32,16], index: 10, kind: input, shape index: {}]
  %s11 = inlined_call_operand.vmem [shape: f32[1,16], index: 11, kind: input, shape index: {}]
  %s12 = inlined_call_operand.hbm [shape: f32[8,16], index: 12, kind: output, shape index: {0}]
  %s13 = inlined_call_operand.hbm [shape: f32[8,8], index: 13, kind: output, shape index: {1}]
  %s14 = inlined_call_operand.hbm [shape: f32[8,8], index: 14, kind: output, shape index: {2}]
  %15 = xla_tuple %s12, %s13, %s14
  %s16 = sld [smem:[#allocation0]]
  $region74: #{tpu_custom_call.1} parent=0
    _
  %s18 = ssub.s32 1, %s16
  %s19 = scalar_select 0, %s18, %s16
  $region1: #{tpu_custom_call.1} parent=0
    #allocation2 [shape = 'u8[4096]{0}', space=vmem, size = 0x1000, scoped, tag = 'output window, operand 0, single buffered']
    #allocation3 [shape = 's32[1]{0}', space=sflag, size = 0x4, scoped, tag = 'scoped memory for tpu_custom_call.1']
    #allocation4 [shape = 'u8[4096]{0}', space=vmem, size = 0x1000, scoped, tag = 'output window, operand 1, single buffered']
    #allocation5 [shape = 's32[1]{0}', space=sflag, size = 0x4, scoped, tag = 'scoped memory for tpu_custom_call.1']
    #allocation6 [shape = 'u8[4096]{0}', space=vmem, size = 0x1000, scoped, tag = 'output window, operand 2, single buffered']
    %20 = vsyncpa [#allocation3], 0
    %21 = vsyncpa [#allocation5], 0
    // Predicated region
    $region2: #{tpu_custom_call.1} parent=1 // pred_check
      _
    $region3: #{tpu_custom_call.1} parent=1 // pred_check_branch
      %23 = sbr.rel (0) target = $region5
    $region4: #{tpu_custom_call.1} parent=1 // pred_region
      _
    $region5: #{tpu_custom_call.1} parent=1 // pred_fallthru
      _
    // Predicated region
    $region6: #{tpu_custom_call.1} parent=1 // pred_check
      _
    $region7: #{tpu_custom_call.1} parent=1 // pred_check_branch
      %25 = sbr.rel (0) target = $region9
    $region8: #{tpu_custom_call.1} parent=1 // pred_region
      _
    $region9: #{tpu_custom_call.1} parent=1 // pred_fallthru
      _
    // Predicated region
    $region10: #{tpu_custom_call.1} parent=1 // pred_check
      _
    $region11: #{tpu_custom_call.1} parent=1 // pred_check_branch
      %27 = sbr.rel (0) target = $region13
    $region12: #{tpu_custom_call.1} parent=1 // pred_region
      _
    $region13: #{tpu_custom_call.1} parent=1 // pred_fallthru
      _
    // Predicated region
    $region14: #{tpu_custom_call.1} parent=1 // pred_check
      _
    $region15: #{tpu_custom_call.1} parent=1 // pred_check_branch
      %29 = sbr.rel (0) target = $region17
    $region16: #{tpu_custom_call.1} parent=1 // pred_region
      _
    $region17: #{tpu_custom_call.1} parent=1 // pred_fallthru
      _
    // Predicated region
    $region18: #{tpu_custom_call.1} parent=1 // pred_check
      _
    $region19: #{tpu_custom_call.1} parent=1 // pred_check_branch
      %31 = sbr.rel (0) target = $region21
    $region20: #{tpu_custom_call.1} parent=1 // pred_region
      _
    $region21: #{tpu_custom_call.1} parent=1 // pred_fallthru
      _
    // Predicated region
    $region22: #{tpu_custom_call.1} parent=1 // pred_check
      _
    $region23: #{tpu_custom_call.1} parent=1 // pred_check_branch
      %33 = sbr.rel (0) target = $region25
    $region24: #{tpu_custom_call.1} parent=1 // pred_region
      _
    $region25: #{tpu_custom_call.1} parent=1 // pred_fallthru
      _
    // Predicated region
    $region26: #{tpu_custom_call.1} parent=1 // pred_check
      _
    $region27: #{tpu_custom_call.1} parent=1 // pred_check_branch
      %35 = sbr.rel (0) target = $region29
    $region28: #{tpu_custom_call.1} parent=1 // pred_region
      _
    $region29: #{tpu_custom_call.1} parent=1 // pred_fallthru
      _
    // Predicated region
    $region30: #{tpu_custom_call.1} parent=1 // pred_check
      _
    $region31: #{tpu_custom_call.1} parent=1 // pred_check_branch
      %37 = sbr.rel (0) target = $region33
    $region32: #{tpu_custom_call.1} parent=1 // pred_region
      _
    $region33: #{tpu_custom_call.1} parent=1 // pred_fallthru
      _
    // Predicated region
    $region34: #{tpu_custom_call.1} parent=1 // pred_check
      _
    $region35: #{tpu_custom_call.1} parent=1 // pred_check_branch
      %39 = sbr.rel (0) target = $region37
    $region36: #{tpu_custom_call.1} parent=1 // pred_region
      _
    $region37: #{tpu_custom_call.1} parent=1 // pred_fallthru
      _
    // Predicated region
    $region38: #{tpu_custom_call.1} parent=1 // pred_check
      _
    $region39: #{tpu_custom_call.1} parent=1 // pred_check_branch
      %41 = sbr.rel (0) target = $region41
    $region40: #{tpu_custom_call.1} parent=1 // pred_region
      _
    $region41: #{tpu_custom_call.1} parent=1 // pred_fallthru
      _
    // Predicated region
    $region42: #{tpu_custom_call.1} parent=1 // pred_check
      _
    $region43: #{tpu_custom_call.1} parent=1 // pred_check_branch
      %43 = sbr.rel (0) target = $region45
    $region44: #{tpu_custom_call.1} parent=1 // pred_region
      _
    $region45: #{tpu_custom_call.1} parent=1 // pred_fallthru
      _
    // Predicated region
    $region46: #{tpu_custom_call.1} parent=1 // pred_check
      _
    $region47: #{tpu_custom_call.1} parent=1 // pred_check_branch
      %45 = sbr.rel (0) target = $region49
    $region48: #{tpu_custom_call.1} parent=1 // pred_region
      _
    $region49: #{tpu_custom_call.1} parent=1 // pred_fallthru
      _
    %v46 = vld [vmem:[%s0] sm:$0xff]
    %v47 = vld [vmem:[%s2] sm:$0xff]
    %v48 = vld [vmem:[%s2 + $0x8] sm:$0xff]
    %v49 = vld [vmem:[%s3] sm:$0x1]
    %v51 = vlaneseq
    %v52 = vshrl.u32 %v51, 7
    %v53 = vsub.s32 0, %v52
    %v54 = vrot.slane %v49, %v53
    %vm56 = vcmask 130048
    %v58 = vsel %vm56, %v46, 0
    %60 = vmatprep.subr.mxu0 0.0
    %61 = vmatpush1.msra.mxu0 %v47
    %62 = vmatprep.subr.mxu0 0.0
    %63 = vmatpush1.msra.mxu0 %v48
    %64 = vmatprep.subr.mxu0 0.0
    %65 = vmatpush1.msra.mxu0 0.0
    %66 = vmatprep.subr.mxu0 0.0
    %67 = vmatpush1.msra.mxu0 0.0
    %68 = vmatprep.subr.mxu0 0.0
    %69 = vmatpush1.msra.mxu0 0.0
    %70 = vmatprep.subr.mxu0 0.0
    %71 = vmatpush1.msra.mxu0 0.0
    %72 = vmatprep.subr.mxu0 0.0
    %73 = vmatpush1.msra.mxu0 0.0
    %74 = vmatprep.subr.mxu0 0.0
    %75 = vmatpush1.msra.mxu0 0.0
    %76 = vmatprep.subr.mxu0 0.0
    %77 = vmatpush1.msra.mxu0 0.0
    %78 = vmatprep.subr.mxu0 0.0
    %79 = vmatpush1.msra.mxu0 0.0
    %80 = vmatprep.subr.mxu0 0.0
    %81 = vmatpush1.msra.mxu0 0.0
    %82 = vmatprep.subr.mxu0 0.0
    %83 = vmatpush1.msra.mxu0 0.0
    %84 = vmatprep.subr.mxu0 0.0
    %85 = vmatpush1.msra.mxu0 0.0
    %86 = vmatprep.subr.mxu0 0.0
    %87 = vmatpush1.msra.mxu0 0.0
    %88 = vmatprep.subr.mxu0 0.0
    %89 = vmatpush1.msra.mxu0 0.0
    %90 = vmatprep.subr.mxu0 0.0
    %91 = vmatpush1.msra.mxu0 0.0
    %92 = vmatprep.subr.mxu0 0.0
    %93 = vmatpush1.msra.mxu0 0.0
    %94 = vmatprep.subr.mxu0 0.0
    %95 = vmatpush1.msra.mxu0 0.0
    %96 = vmatprep.subr.mxu0 0.0
    %97 = vmatpush1.msra.mxu0 0.0
    %98 = vmatprep.subr.mxu0 0.0
    %99 = vmatpush1.msra.mxu0 0.0
    %100 = vmatprep.subr.mxu0 0.0
    %101 = vmatpush1.msra.mxu0 0.0
    %102 = vmatprep.subr.mxu0 0.0
    %103 = vmatpush1.msra.mxu0 0.0
    %104 = vmatprep.subr.mxu0 0.0
    %105 = vmatpush1.msra.mxu0 0.0
    %106 = vmatprep.subr.mxu0 0.0
    %107 = vmatpush1.msra.mxu0 0.0
    %108 = vmatprep.subr.mxu0 0.0
    %109 = vmatpush1.msra.mxu0 0.0
    %110 = vmatprep.subr.mxu0 0.0
    %111 = vmatpush1.msra.mxu0 0.0
    %112 = vmatprep.subr.mxu0 0.0
    %113 = vmatpush1.msra.mxu0 0.0
    %114 = vmatprep.subr.mxu0 0.0
    %115 = vmatpush1.msra.mxu0 0.0
    %116 = vmatprep.subr.mxu0 0.0
    %117 = vmatpush1.msra.mxu0 0.0
    %118 = vmatprep.subr.mxu0 0.0
    %119 = vmatpush1.msra.mxu0 0.0
    %120 = vmatprep.subr.mxu0 0.0
    %121 = vmatpush1.msra.mxu0 0.0
    %122 = vmatprep.subr.mxu0 0.0
    %123 = vmatpush1.msra.mxu0 0.0
    %124 = vmatprep.mubr.f32.mxu0 0.0
    %125 = vmatmul.mubr.f32.gmra.mrb[0].mxu0 %v58
    %v126 = vpop.f32.mrb[0].mxu0
    %v127 = vadd.f32 %v54, %v126
    %v128 = vpop.f32.mrb[0].mxu0
    %129 = vdwg.mxu0
    %v130 = vmax.f32 %v127, 0.0
    %v131 = vld [vmem:[%s4] sm:$0xff]
    %v132 = vld [vmem:[%s4 + $0x8] sm:$0xff]
    %v133 = vld [vmem:[%s4 + $0x10] sm:$0xff]
    %v134 = vld [vmem:[%s4 + $0x18] sm:$0xff]
    %v135 = vld [vmem:[%s5] sm:$0x1]
    %v137 = vlaneseq
    %v138 = vshrl.u32 %v137, 7
    %v139 = vsub.s32 0, %v138
    %v140 = vrot.slane %v135, %v139
    %vm142 = vcmask 261120
    %v144 = vsel %vm142, %v130, 0
    %146 = vmatprep.subr.mxu0 0.0
    %147 = vmatpush1.msra.mxu0 %v131
    %148 = vmatprep.subr.mxu0 0.0
    %149 = vmatpush1.msra.mxu0 %v132
    %150 = vmatprep.subr.mxu0 0.0
    %151 = vmatpush1.msra.mxu0 %v133
    %152 = vmatprep.subr.mxu0 0.0
    %153 = vmatpush1.msra.mxu0 %v134
    %154 = vmatprep.subr.mxu0 0.0
    %155 = vmatpush1.msra.mxu0 0.0
    %156 = vmatprep.subr.mxu0 0.0
    %157 = vmatpush1.msra.mxu0 0.0
    %158 = vmatprep.subr.mxu0 0.0
    %159 = vmatpush1.msra.mxu0 0.0
    %160 = vmatprep.subr.mxu0 0.0
    %161 = vmatpush1.msra.mxu0 0.0
    %162 = vmatprep.subr.mxu0 0.0
    %163 = vmatpush1.msra.mxu0 0.0
    %164 = vmatprep.subr.mxu0 0.0
    %165 = vmatpush1.msra.mxu0 0.0
    %166 = vmatprep.subr.mxu0 0.0
    %167 = vmatpush1.msra.mxu0 0.0
    %168 = vmatprep.subr.mxu0 0.0
    %169 = vmatpush1.msra.mxu0 0.0
    %170 = vmatprep.subr.mxu0 0.0
    %171 = vmatpush1.msra.mxu0 0.0
    %172 = vmatprep.subr.mxu0 0.0
    %173 = vmatpush1.msra.mxu0 0.0
    %174 = vmatprep.subr.mxu0 0.0
    %175 = vmatpush1.msra.mxu0 0.0
    %176 = vmatprep.subr.mxu0 0.0
    %177 = vmatpush1.msra.mxu0 0.0
    %178 = vmatprep.subr.mxu0 0.0
    %179 = vmatpush1.msra.mxu0 0.0
    %180 = vmatprep.subr.mxu0 0.0
    %181 = vmatpush1.msra.mxu0 0.0
    %182 = vmatprep.subr.mxu0 0.0
    %183 = vmatpush1.msra.mxu0 0.0
    %184 = vmatprep.subr.mxu0 0.0
    %185 = vmatpush1.msra.mxu0 0.0
    %186 = vmatprep.subr.mxu0 0.0
    %187 = vmatpush1.msra.mxu0 0.0
    %188 = vmatprep.subr.mxu0 0.0
    %189 = vmatpush1.msra.mxu0 0.0
    %190 = vmatprep.subr.mxu0 0.0
    %191 = vmatpush1.msra.mxu0 0.0
    %192 = vmatprep.subr.mxu0 0.0
    %193 = vmatpush1.msra.mxu0 0.0
    %194 = vmatprep.subr.mxu0 0.0
    %195 = vmatpush1.msra.mxu0 0.0
    %196 = vmatprep.subr.mxu0 0.0
    %197 = vmatpush1.msra.mxu0 0.0
    %198 = vmatprep.subr.mxu0 0.0
    %199 = vmatpush1.msra.mxu0 0.0
    %200 = vmatprep.subr.mxu0 0.0
    %201 = vmatpush1.msra.mxu0 0.0
    %202 = vmatprep.subr.mxu0 0.0
    %203 = vmatpush1.msra.mxu0 0.0
    %204 = vmatprep.subr.mxu0 0.0
    %205 = vmatpush1.msra.mxu0 0.0
    %206 = vmatprep.subr.mxu0 0.0
    %207 = vmatpush1.msra.mxu0 0.0
    %208 = vmatprep.subr.mxu0 0.0
    %209 = vmatpush1.msra.mxu0 0.0
    %210 = vmatprep.mubr.f32.mxu0 0.0
    %211 = vmatmul.mubr.f32.gmra.mrb[0].mxu0 %v144
    %v212 = vpop.f32.mrb[0].mxu0
    %v213 = vadd.f32 %v140, %v212
    %v214 = vpop.f32.mrb[0].mxu0
    %215 = vdwg.mxu0
    %v216 = vld [vmem:[%s6] sm:$0xff]
    %v217 = vld [vmem:[%s6 + $0x8] sm:$0xff]
    %v218 = vld [vmem:[%s6 + $0x10] sm:$0xff]
    %v219 = vld [vmem:[%s6 + $0x18] sm:$0xff]
    %v220 = vld [vmem:[%s7] sm:$0x1]
    %v222 = vlaneseq
    %v223 = vshrl.u32 %v222, 7
    %v224 = vsub.s32 0, %v223
    %v225 = vrot.slane %v220, %v224
    %227 = vmatprep.subr.mxu0 0.0
    %228 = vmatpush1.msra.mxu0 %v216
    %229 = vmatprep.subr.mxu0 0.0
    %230 = vmatpush1.msra.mxu0 %v217
    %231 = vmatprep.subr.mxu0 0.0
    %232 = vmatpush1.msra.mxu0 %v218
    %233 = vmatprep.subr.mxu0 0.0
    %234 = vmatpush1.msra.mxu0 %v219
    %235 = vmatprep.subr.mxu0 0.0
    %236 = vmatpush1.msra.mxu0 0.0
    %237 = vmatprep.subr.mxu0 0.0
    %238 = vmatpush1.msra.mxu0 0.0
    %239 = vmatprep.subr.mxu0 0.0
    %240 = vmatpush1.msra.mxu0 0.0
    %241 = vmatprep.subr.mxu0 0.0
    %242 = vmatpush1.msra.mxu0 0.0
    %243 = vmatprep.subr.mxu0 0.0
    %244 = vmatpush1.msra.mxu0 0.0
    %245 = vmatprep.subr.mxu0 0.0
    %246 = vmatpush1.msra.mxu0 0.0
    %247 = vmatprep.subr.mxu0 0.0
    %248 = vmatpush1.msra.mxu0 0.0
    %249 = vmatprep.subr.mxu0 0.0
    %250 = vmatpush1.msra.mxu0 0.0
    %251 = vmatprep.subr.mxu0 0.0
    %252 = vmatpush1.msra.mxu0 0.0
    %253 = vmatprep.subr.mxu0 0.0
    %254 = vmatpush1.msra.mxu0 0.0
    %255 = vmatprep.subr.mxu0 0.0
    %256 = vmatpush1.msra.mxu0 0.0
    %257 = vmatprep.subr.mxu0 0.0
    %258 = vmatpush1.msra.mxu0 0.0
    %259 = vmatprep.subr.mxu0 0.0
    %260 = vmatpush1.msra.mxu0 0.0
    %261 = vmatprep.subr.mxu0 0.0
    %262 = vmatpush1.msra.mxu0 0.0
    %263 = vmatprep.subr.mxu0 0.0
    %264 = vmatpush1.msra.mxu0 0.0
    %265 = vmatprep.subr.mxu0 0.0
    %266 = vmatpush1.msra.mxu0 0.0
    %267 = vmatprep.subr.mxu0 0.0
    %268 = vmatpush1.msra.mxu0 0.0
    %269 = vmatprep.subr.mxu0 0.0
    %270 = vmatpush1.msra.mxu0 0.0
    %271 = vmatprep.subr.mxu0 0.0
    %272 = vmatpush1.msra.mxu0 0.0
    %273 = vmatprep.subr.mxu0 0.0
    %274 = vmatpush1.msra.mxu0 0.0
    %275 = vmatprep.subr.mxu0 0.0
    %276 = vmatpush1.msra.mxu0 0.0
    %277 = vmatprep.subr.mxu0 0.0
    %278 = vmatpush1.msra.mxu0 0.0
    %279 = vmatprep.subr.mxu0 0.0
    %280 = vmatpush1.msra.mxu0 0.0
    %281 = vmatprep.subr.mxu0 0.0
    %282 = vmatpush1.msra.mxu0 0.0
    %283 = vmatprep.subr.mxu0 0.0
    %284 = vmatpush1.msra.mxu0 0.0
    %285 = vmatprep.subr.mxu0 0.0
    %286 = vmatpush1.msra.mxu0 0.0
    %287 = vmatprep.subr.mxu0 0.0
    %288 = vmatpush1.msra.mxu0 0.0
    %289 = vmatprep.subr.mxu0 0.0
    %290 = vmatpush1.msra.mxu0 0.0
    %291 = vmatprep.mubr.f32.mxu0 0.0
    %292 = vmatmul.mubr.f32.gmra.mrb[0].mxu0 %v144
    %v293 = vpop.f32.mrb[0].mxu0
    %v294 = vadd.f32 %v225, %v293
    %v295 = vpop.f32.mrb[0].mxu0
    %296 = vdwg.mxu0
    %v297 = vld [vmem:[%s1] sm:$0xff]
    %v298 = vmul.f32 %v294, 0.5
    %v299 = vmul.f32 %v298, 1.442695
    %v300 = vpow.pop %v299
    %v301 = vmul.f32 %v297, %v300
    %v302 = vadd.f32 %v213, %v301
    %v303 = vld [vmem:[%s8] sm:$0xff]
    %v304 = vld [vmem:[%s9] sm:$0x1]
    %v306 = vlaneseq
    %v307 = vshrl.u32 %v306, 7
    %v308 = vsub.s32 0, %v307
    %v309 = vrot.slane %v304, %v308
    %vm311 = vcmask 64512
    %v313 = vsel %vm311, %v302, 0
    %315 = vmatprep.subr.mxu0 0.0
    %316 = vmatpush1.msra.mxu0 %v303
    %317 = vmatprep.subr.mxu0 0.0
    %318 = vmatpush1.msra.mxu0 0.0
    %319 = vmatprep.subr.mxu0 0.0
    %320 = vmatpush1.msra.mxu0 0.0
    %321 = vmatprep.subr.mxu0 0.0
    %322 = vmatpush1.msra.mxu0 0.0
    %323 = vmatprep.subr.mxu0 0.0
    %324 = vmatpush1.msra.mxu0 0.0
    %325 = vmatprep.subr.mxu0 0.0
    %326 = vmatpush1.msra.mxu0 0.0
    %327 = vmatprep.subr.mxu0 0.0
    %328 = vmatpush1.msra.mxu0 0.0
    %329 = vmatprep.subr.mxu0 0.0
    %330 = vmatpush1.msra.mxu0 0.0
    %331 = vmatprep.subr.mxu0 0.0
    %332 = vmatpush1.msra.mxu0 0.0
    %333 = vmatprep.subr.mxu0 0.0
    %334 = vmatpush1.msra.mxu0 0.0
    %335 = vmatprep.subr.mxu0 0.0
    %336 = vmatpush1.msra.mxu0 0.0
    %337 = vmatprep.subr.mxu0 0.0
    %338 = vmatpush1.msra.mxu0 0.0
    %339 = vmatprep.subr.mxu0 0.0
    %340 = vmatpush1.msra.mxu0 0.0
    %341 = vmatprep.subr.mxu0 0.0
    %342 = vmatpush1.msra.mxu0 0.0
    %343 = vmatprep.subr.mxu0 0.0
    %344 = vmatpush1.msra.mxu0 0.0
    %345 = vmatprep.subr.mxu0 0.0
    %346 = vmatpush1.msra.mxu0 0.0
    %347 = vmatprep.subr.mxu0 0.0
    %348 = vmatpush1.msra.mxu0 0.0
    %349 = vmatprep.subr.mxu0 0.0
    %350 = vmatpush1.msra.mxu0 0.0
    %351 = vmatprep.subr.mxu0 0.0
    %352 = vmatpush1.msra.mxu0 0.0
    %353 = vmatprep.subr.mxu0 0.0
    %354 = vmatpush1.msra.mxu0 0.0
    %355 = vmatprep.subr.mxu0 0.0
    %356 = vmatpush1.msra.mxu0 0.0
    %357 = vmatprep.subr.mxu0 0.0
    %358 = vmatpush1.msra.mxu0 0.0
    %359 = vmatprep.subr.mxu0 0.0
    %360 = vmatpush1.msra.mxu0 0.0
    %361 = vmatprep.subr.mxu0 0.0
    %362 = vmatpush1.msra.mxu0 0.0
    %363 = vmatprep.subr.mxu0 0.0
    %364 = vmatpush1.msra.mxu0 0.0
    %365 = vmatprep.subr.mxu0 0.0
    %366 = vmatpush1.msra.mxu0 0.0
    %367 = vmatprep.subr.mxu0 0.0
    %368 = vmatpush1.msra.mxu0 0.0
    %369 = vmatprep.subr.mxu0 0.0
    %370 = vmatpush1.msra.mxu0 0.0
    %371 = vmatprep.subr.mxu0 0.0
    %372 = vmatpush1.msra.mxu0 0.0
    %373 = vmatprep.subr.mxu0 0.0
    %374 = vmatpush1.msra.mxu0 0.0
    %375 = vmatprep.subr.mxu0 0.0
    %376 = vmatpush1.msra.mxu0 0.0
    %377 = vmatprep.subr.mxu0 0.0
    %378 = vmatpush1.msra.mxu0 0.0
    %379 = vmatprep.mubr.f32.mxu0 0.0
    %380 = vmatmul.mubr.f32.gmra.mrb[0].mxu0 %v313
    %v381 = vpop.f32.mrb[0].mxu0
    %v382 = vadd.f32 %v309, %v381
    %v383 = vpop.f32.mrb[0].mxu0
    %384 = vdwg.mxu0
    %v385 = vmax.f32 %v382, 0.0
    %v386 = vld [vmem:[%s10] sm:$0xff]
    %v387 = vld [vmem:[%s10 + $0x8] sm:$0xff]
    %v388 = vld [vmem:[%s10 + $0x10] sm:$0xff]
    %v389 = vld [vmem:[%s10 + $0x18] sm:$0xff]
    %v390 = vld [vmem:[%s11] sm:$0x1]
    %v392 = vlaneseq
    %v393 = vshrl.u32 %v392, 7
    %v394 = vsub.s32 0, %v393
    %v395 = vrot.slane %v390, %v394
    %v398 = vsel %vm142, %v385, 0
    %400 = vmatprep.subr.mxu0 0.0
    %401 = vmatpush1.msra.mxu0 %v386
    %402 = vmatprep.subr.mxu0 0.0
    %403 = vmatpush1.msra.mxu0 %v387
    %404 = vmatprep.subr.mxu0 0.0
    %405 = vmatpush1.msra.mxu0 %v388
    %406 = vmatprep.subr.mxu0 0.0
    %407 = vmatpush1.msra.mxu0 %v389
    %408 = vmatprep.subr.mxu0 0.0
    %409 = vmatpush1.msra.mxu0 0.0
    %410 = vmatprep.subr.mxu0 0.0
    %411 = vmatpush1.msra.mxu0 0.0
    %412 = vmatprep.subr.mxu0 0.0
    %413 = vmatpush1.msra.mxu0 0.0
    %414 = vmatprep.subr.mxu0 0.0
    %415 = vmatpush1.msra.mxu0 0.0
    %416 = vmatprep.subr.mxu0 0.0
    %417 = vmatpush1.msra.mxu0 0.0
    %418 = vmatprep.subr.mxu0 0.0
    %419 = vmatpush1.msra.mxu0 0.0
    %420 = vmatprep.subr.mxu0 0.0
    %421 = vmatpush1.msra.mxu0 0.0
    %422 = vmatprep.subr.mxu0 0.0
    %423 = vmatpush1.msra.mxu0 0.0
    %424 = vmatprep.subr.mxu0 0.0
    %425 = vmatpush1.msra.mxu0 0.0
    %426 = vmatprep.subr.mxu0 0.0
    %427 = vmatpush1.msra.mxu0 0.0
    %428 = vmatprep.subr.mxu0 0.0
    %429 = vmatpush1.msra.mxu0 0.0
    %430 = vmatprep.subr.mxu0 0.0
    %431 = vmatpush1.msra.mxu0 0.0
    %432 = vmatprep.subr.mxu0 0.0
    %433 = vmatpush1.msra.mxu0 0.0
    %434 = vmatprep.subr.mxu0 0.0
    %435 = vmatpush1.msra.mxu0 0.0
    %436 = vmatprep.subr.mxu0 0.0
    %437 = vmatpush1.msra.mxu0 0.0
    %438 = vmatprep.subr.mxu0 0.0
    %439 = vmatpush1.msra.mxu0 0.0
    %440 = vmatprep.subr.mxu0 0.0
    %441 = vmatpush1.msra.mxu0 0.0
    %442 = vmatprep.subr.mxu0 0.0
    %443 = vmatpush1.msra.mxu0 0.0
    %444 = vmatprep.subr.mxu0 0.0
    %445 = vmatpush1.msra.mxu0 0.0
    %446 = vmatprep.subr.mxu0 0.0
    %447 = vmatpush1.msra.mxu0 0.0
    %448 = vmatprep.subr.mxu0 0.0
    %449 = vmatpush1.msra.mxu0 0.0
    %450 = vmatprep.subr.mxu0 0.0
    %451 = vmatpush1.msra.mxu0 0.0
    %452 = vmatprep.subr.mxu0 0.0
    %453 = vmatpush1.msra.mxu0 0.0
    %454 = vmatprep.subr.mxu0 0.0
    %455 = vmatpush1.msra.mxu0 0.0
    %456 = vmatprep.subr.mxu0 0.0
    %457 = vmatpush1.msra.mxu0 0.0
    %458 = vmatprep.subr.mxu0 0.0
    %459 = vmatpush1.msra.mxu0 0.0
    %460 = vmatprep.subr.mxu0 0.0
    %461 = vmatpush1.msra.mxu0 0.0
    %462 = vmatprep.subr.mxu0 0.0
    %463 = vmatpush1.msra.mxu0 0.0
    %464 = vmatprep.mubr.f32.mxu0 0.0
    %465 = vmatmul.mubr.f32.gmra.mrb[0].mxu0 %v398
    %v466 = vpop.f32.mrb[0].mxu0
    %v467 = vadd.f32 %v395, %v466
    %v468 = vpop.f32.mrb[0].mxu0
    %469 = vdwg.mxu0
    %v470 = vxor.u32 %v467, 2147483648
    %v471 = vmul.f32 %v470, 1.442695
    %v472 = vpow.pop %v471
    %v473 = vadd.f32 %v472, 1.0
    %v474 = vrcp.pop %v473
    %v475 = vmul.f32 1.0, %v474
    %476 = vst.msk [vmem:[#allocation2] sm:$0xff] %vm56, %v475
    %477 = vst.msk [vmem:[#allocation4] sm:$0xff] %vm311, %v213
    %478 = vst.msk [vmem:[#allocation6] sm:$0xff] %vm311, %v294
    // Predicated region
    $region50: #{tpu_custom_call.1} parent=1 // pred_check
      _
    $region51: #{tpu_custom_call.1} parent=1 // pred_check_branch
      %480 = sbr.rel (0) target = $region53
    $region52: #{tpu_custom_call.1} parent=1 // pred_region
      %s482 = ssub.s32 128, 128
      %483 = vsyncadd [#allocation3], %s482
      %s485 = sshll.u32 [#allocation2], 4
      %s486 = int_to_ptr.vmem [resolvable:$true] %s485
      %488 = dma.vmem_to_hbm [thread:$0]  %s486, 128, %s12, [#allocation3]
    $region53: #{tpu_custom_call.1} parent=1 // pred_fallthru
      _
    // Predicated region
    $region54: #{tpu_custom_call.1} parent=1 // pred_check
      _
    $region55: #{tpu_custom_call.1} parent=1 // pred_check_branch
      %490 = sbr.rel (0) target = $region57
    $region56: #{tpu_custom_call.1} parent=1 // pred_region
      %s492 = ssub.s32 128, 128
      %493 = vsyncadd [#allocation5], %s492
      %s495 = sshll.u32 [#allocation4], 4
      %s496 = int_to_ptr.vmem [resolvable:$true] %s495
      %498 = dma.vmem_to_hbm [thread:$0]  %s496, 128, %s13, [#allocation5]
    $region57: #{tpu_custom_call.1} parent=1 // pred_fallthru
      _
    // Predicated region
    $region58: #{tpu_custom_call.1} parent=1 // pred_check
      _
    $region59: #{tpu_custom_call.1} parent=1 // pred_check_branch
      %500 = sbr.rel (0) target = $region61
    $region60: #{tpu_custom_call.1} parent=1 // pred_region
      %s502 = ssub.s32 128, 128
      %503 = vsyncadd [#allocation5], %s502
      %s505 = sshll.u32 [#allocation6], 4
      %s506 = int_to_ptr.vmem [resolvable:$true] %s505
      %508 = dma.vmem_to_hbm [thread:$0]  %s506, 128, %s14, [#allocation5]
    $region61: #{tpu_custom_call.1} parent=1 // pred_fallthru
      _
    // Predicated region
    $region62: #{tpu_custom_call.1} parent=1 // pred_check
      _
    $region63: #{tpu_custom_call.1} parent=1 // pred_check_branch
      %510 = sbr.rel (0) target = $region65
    $region64: #{tpu_custom_call.1} parent=1 // pred_region
      %511 = dma.done [#allocation3], 128
    $region65: #{tpu_custom_call.1} parent=1 // pred_fallthru
      _
    // Predicated region
    $region66: #{tpu_custom_call.1} parent=1 // pred_check
      _
    $region67: #{tpu_custom_call.1} parent=1 // pred_check_branch
      %513 = sbr.rel (0) target = $region69
    $region68: #{tpu_custom_call.1} parent=1 // pred_region
      %514 = dma.done [#allocation5], 128
    $region69: #{tpu_custom_call.1} parent=1 // pred_fallthru
      _
    // Predicated region
    $region70: #{tpu_custom_call.1} parent=1 // pred_check
      _
    $region71: #{tpu_custom_call.1} parent=1 // pred_check_branch
      %516 = sbr.rel (0) target = $region73
    $region72: #{tpu_custom_call.1} parent=1 // pred_region
      %517 = dma.done [#allocation5], 128
    $region73: #{tpu_custom_call.1} parent=1 // pred_fallthru
      _
    %518 = vsyncpa [#allocation3], 1
    %519 = vsyncpa [#allocation5], 1

</llo_original>
